<compile_context>
chip_gen: v7x
topology: tpu7x:2x2x1
jax: 0.10.0
libtpu: 0.0.40
codegen_flags: <defaults>
</compile_context>

<pallas_src>
import functools

import jax
import jax.numpy as jnp
from jax import lax
from jax.experimental import pallas as pl
from jax.experimental.pallas import tpu as pltpu


def _round_up(x, m):
    return ((x + m - 1) // m) * m


def _decoder_kernel(x_ref, w_ref, b_ref, o_ref):
    # x_ref: (TM, K)   activation tile (resident across the inner N axis)
    # w_ref: (TN, K)   weight tile, streamed along the vocab axis
    # b_ref: (1, TN)   bias tile (f32)
    # o_ref: (TM, TN)  output tile
    acc = lax.dot_general(
        x_ref[...],
        w_ref[...],
        dimension_numbers=(((1,), (1,)), ((), ())),   # contract K with K (no transpose)
        preferred_element_type=jnp.float32,
    )
    o_ref[...] = (acc + b_ref[...]).astype(o_ref.dtype)


@functools.partial(jax.jit, static_argnames=("tile_m", "tile_n", "compute_dtype"))
def decoder_forward(inp, weight, bias, *, tile_m=512, tile_n=512, compute_dtype=None):
    """inp: (seq, batch, ninp); weight: (ntoken, ninp); bias: (ntoken,).

    Returns (batch, seq, ntoken) — identical semantics to
    `nn.Linear(ninp, ntoken)(inp).permute(1, 0, 2)`.
    """
    S, B, K = inp.shape
    ntoken = weight.shape[0]
    out_dtype = inp.dtype
    cdt = jnp.dtype(compute_dtype) if compute_dtype is not None else jnp.dtype(inp.dtype)

    M = B * S
    # Fuse permute(1,0,2): flatten batch-major so the (M, ntoken) output is
    # already in (batch, seq, vocab) order.  The transpose here touches the
    # *small* input tensor (ninp wide) instead of the huge output (ntoken wide).
    x2d = jnp.transpose(inp, (1, 0, 2)).reshape(M, K).astype(cdt)
    w2d = weight.astype(cdt)                       # (ntoken, K), used as-is (no .T)
    b2d = bias.reshape(1, ntoken).astype(jnp.float32)

    # Tile sizes: clamp to (padded) problem size; keep sublane/lane alignment.
    tm = min(tile_m, _round_up(M, 8))
    tn = min(tile_n, _round_up(ntoken, 128))
    m_pad = _round_up(M, tm)
    n_pad = _round_up(ntoken, tn)

    if m_pad != M:
        x2d = jnp.pad(x2d, ((0, m_pad - M), (0, 0)))
    if n_pad != ntoken:
        w2d = jnp.pad(w2d, ((0, n_pad - ntoken), (0, 0)))
        b2d = jnp.pad(b2d, ((0, 0), (0, n_pad - ntoken)))

    grid = (m_pad // tm, n_pad // tn)              # M outer, N inner (x tile resident)

    # VMEM budget: double-buffered tiles + headroom; respects v7x's smaller VMEM
    # unless the user explicitly asks for huge tiles.
    c_bytes = cdt.itemsize
    o_bytes = jnp.dtype(out_dtype).itemsize
    tile_bytes = (tm * K + tn * K) * c_bytes + tm * tn * o_bytes + tn * 4
    vmem_limit = int(min(max(2 * tile_bytes + (8 << 20), 32 << 20), 100 << 20))

    cost = pl.CostEstimate(
        flops=2 * M * K * ntoken,
        transcendentals=0,
        bytes_accessed=(M * K * c_bytes + ntoken * K * c_bytes
                        + ntoken * 4 + M * ntoken * o_bytes),
    )

    out = pl.pallas_call(
        _decoder_kernel,
        out_shape=jax.ShapeDtypeStruct((m_pad, n_pad), out_dtype),
        grid_spec=pltpu.PrefetchScalarGridSpec(
            num_scalar_prefetch=0,
            grid=grid,
            in_specs=[
                pl.BlockSpec((tm, K), lambda i, j: (i, 0)),   # activations: resident over j
                pl.BlockSpec((tn, K), lambda i, j: (j, 0)),   # weight: streams along vocab
                pl.BlockSpec((1, tn), lambda i, j: (0, j)),   # bias tile
            ],
            out_specs=pl.BlockSpec((tm, tn), lambda i, j: (i, j)),
        ),
        compiler_params=pltpu.CompilerParams(
            dimension_semantics=("parallel", "parallel"),
            vmem_limit_bytes=vmem_limit,
        ),
        cost_estimate=cost,
    )(x2d, w2d, b2d)

    out = out[:M, :ntoken]                          # drop padding (no-op when aligned)
    return out.reshape(B, S, ntoken)


def _reference(inp, weight, bias):
    return (jnp.einsum("sbk,nk->sbn", inp, weight) + bias).transpose(1, 0, 2)


if __name__ == "__main__":
    key = jax.random.PRNGKey(0)
    k_inp, k_w = jax.random.split(key)

    # Small shapes consistent with the module: seq=8, batch=2, ninp=128, ntoken=256
    S, B, NINP, NTOKEN = 8, 2, 128, 256

    inp = jax.random.normal(k_inp, (S, B, NINP), dtype=jnp.float32)

    # Deterministic init matching Decoder.init_weights(): weight ~ U(-0.1, 0.1), bias = 0
    initrange = 0.1
    weight = jax.random.uniform(
        k_w, (NTOKEN, NINP), dtype=jnp.float32, minval=-initrange, maxval=initrange
    )
    bias = jnp.zeros((NTOKEN,), dtype=jnp.float32)

    out = decoder_forward(inp, weight, bias)
    out = jax.block_until_ready(out)

    ref = _reference(inp, weight, bias)
    assert out.shape == (B, S, NTOKEN), out.shape
    assert jnp.allclose(out, ref, atol=1e-5, rtol=1e-5), "mismatch vs reference"

    # Also exercise the padding path: vocab size not a multiple of the tile.
    NTOKEN2 = 200
    weight2 = weight[:NTOKEN2]
    bias2 = jnp.linspace(-0.5, 0.5, NTOKEN2, dtype=jnp.float32)
    out2 = jax.block_until_ready(decoder_forward(inp, weight2, bias2))
    ref2 = _reference(inp, weight2, bias2)
    assert out2.shape == (B, S, NTOKEN2), out2.shape
    assert jnp.allclose(out2, ref2, atol=1e-5, rtol=1e-5), "mismatch vs reference (padded)"

    print("KERNEL_OK")
</pallas_src>

<mosaic_0001>
module attributes {stable_mosaic.version = 11 : i64} {
  func.func @_decoder_kernel(%arg0: i32, %arg1: i32, %arg2: memref<16x128xf32, #tpu.memory_space<vmem>>, %arg3: memref<256x128xf32, #tpu.memory_space<vmem>>, %arg4: memref<1x256xf32, #tpu.memory_space<vmem>>, %arg5: memref<16x256xf32, #tpu.memory_space<vmem>>) attributes {dimension_semantics = [#tpu.dimension_semantics<parallel>, #tpu.dimension_semantics<parallel>], iteration_bounds = array<i64: 1, 1>, scalar_prefetch = 0 : i64, scratch_operands = 0 : i64, tpu.core_type = #tpu.core_type<tc>, window_params = [{transform_indices = @transform_0, window_bounds = array<i64: 16, 128>}, {transform_indices = @transform_1, window_bounds = array<i64: 256, 128>}, {transform_indices = @transform_2, window_bounds = array<i64: 1, 256>}, {transform_indices = @transform_3, window_bounds = array<i64: 16, 256>}]} {
    %c0 = arith.constant 0 : index
    %c0_0 = arith.constant 0 : index
    %0 = vector.load %arg2[%c0, %c0_0] : memref<16x128xf32, #tpu.memory_space<vmem>>, vector<16x128xf32>
    %c0_1 = arith.constant 0 : index
    %c0_2 = arith.constant 0 : index
    %1 = vector.load %arg3[%c0_1, %c0_2] : memref<256x128xf32, #tpu.memory_space<vmem>>, vector<256x128xf32>
    %cst = arith.constant dense<0.000000e+00> : vector<16x256xf32>
    %2 = tpu.matmul %0, %1, %cst {dimension_numbers = #tpu.dot_dimension_numbers<[1], [1], [0], [0], [0, 0, 1, 0], [], []>} : vector<16x128xf32>, vector<256x128xf32>, vector<16x256xf32> -> vector<16x256xf32>
    %c0_3 = arith.constant 0 : index
    %c0_4 = arith.constant 0 : index
    %3 = vector.load %arg4[%c0_3, %c0_4] : memref<1x256xf32, #tpu.memory_space<vmem>>, vector<1x256xf32>
    %4 = vector.broadcast %3 : vector<1x256xf32> to vector<16x256xf32>
    %5 = arith.addf %2, %4 : vector<16x256xf32>
    %c0_5 = arith.constant 0 : index
    %c0_6 = arith.constant 0 : index
    %6 = vector.load %arg5[%c0_5, %c0_6] : memref<16x256xf32, #tpu.memory_space<vmem>>, vector<16x256xf32>
    tpu.vector_store %arg5[%c0_5, %c0_6], %5 {strides = array<i32>} : memref<16x256xf32, #tpu.memory_space<vmem>>, vector<16x256xf32>,
    return
  }
  func.func @transform_0(%arg0: i32, %arg1: i32) -> (i32, i32) {
    %c0_i32 = arith.constant 0 : i32
    %c0_i32_0 = arith.constant 0 : i32
    return %arg0, %c0_i32 : i32, i32
  }
  func.func @transform_1(%arg0: i32, %arg1: i32) -> (i32, i32) {
    %c0_i32 = arith.constant 0 : i32
    %c0_i32_0 = arith.constant 0 : i32
    return %arg1, %c0_i32 : i32, i32
  }
  func.func @transform_2(%arg0: i32, %arg1: i32) -> (i32, i32) {
    %c0_i32 = arith.constant 0 : i32
    %c0_i32_0 = arith.constant 0 : i32
    return %c0_i32, %arg1 : i32, i32
  }
  func.func @transform_3(%arg0: i32, %arg1: i32) -> (i32, i32) {
    %c0_i32 = arith.constant 0 : i32
    return %arg0, %arg1 : i32, i32
  }
}

</mosaic_0001>

<llo_original>
// kernel: decoder_forward.1
$region0: #{decoder_forward.1}
  #allocation0 [shape = 'u32[]', space=smem, size = 0x4, offset = 0x4, fixed_abs, tag = 'smem constant byte address 0x4 - core index']
  #allocation1 [shape = 'u32[144,128]{1,0:T(1,128)}', space=vmem, size = 0x12000, scoped, tag = 'internal scratch']
  %s0 = inlined_call_operand.vmem [shape: f32[16,128], index: 0, kind: input, shape index: {}]
  %s1 = inlined_call_operand.hbm [shape: f32[256,128], index: 1, kind: input, shape index: {}]
  %s2 = inlined_call_operand.vmem [shape: f32[1,256], index: 2, kind: input, shape index: {}]
  %s3 = inlined_call_operand.hbm [shape: f32[16,256], index: 3, kind: output, shape index: {}]
  %s4 = sld [smem:[#allocation0]]
  $region26: #{decoder_forward.1} parent=0
    _
  %s6 = ssub.s32 1, %s4
  %s7 = scalar_select 0, %s6, %s4
  $region1: #{decoder_forward.1} parent=0
    #allocation2 [shape = 'u8[131072]{0}', space=vmem, size = 0x20000, scoped, tag = 'input window, operand 1, single buffered']
    #allocation3 [shape = 's32[1]{0}', space=sflag, size = 0x4, scoped, tag = 'scoped memory for decoder_forward.1']
    #allocation4 [shape = 's32[1]{0}', space=sflag, size = 0x4, scoped, tag = 'scoped memory for decoder_forward.1']
    #allocation5 [shape = 'u8[16384]{0}', space=vmem, size = 0x4000, scoped, tag = 'output window, operand 0, single buffered']
    %8 = vsyncpa [#allocation3], 0
    %9 = vsyncpa [#allocation4], 0
    // Predicated region
    $region2: #{decoder_forward.1} parent=1 // pred_check
      _
    $region3: #{decoder_forward.1} parent=1 // pred_check_branch
      %11 = sbr.rel (0) target = $region5
    $region4: #{decoder_forward.1} parent=1 // pred_region
      _
    $region5: #{decoder_forward.1} parent=1 // pred_fallthru
      _
    // Predicated region
    $region6: #{decoder_forward.1} parent=1 // pred_check
      _
    $region7: #{decoder_forward.1} parent=1 // pred_check_branch
      %13 = sbr.rel (0) target = $region9
    $region8: #{decoder_forward.1} parent=1 // pred_region
      %s15 = ssub.s32 4096, 4096
      %16 = vsyncadd [#allocation3], %s15
      %s17 = sshll.u32 [#allocation2], 4
      %s18 = int_to_ptr.vmem [resolvable:$true] %s17
      %23 = dma.hbm_to_vmem [thread:$0]  %s1, 4096, %s18, [#allocation3], 128, 128, 8
    $region9: #{decoder_forward.1} parent=1 // pred_fallthru
      _
    // Predicated region
    $region10: #{decoder_forward.1} parent=1 // pred_check
      _
    $region11: #{decoder_forward.1} parent=1 // pred_check_branch
      %25 = sbr.rel (0) target = $region13
    $region12: #{decoder_forward.1} parent=1 // pred_region
      _
    $region13: #{decoder_forward.1} parent=1 // pred_fallthru
      _
    // Predicated region
    $region14: #{decoder_forward.1} parent=1 // pred_check
      _
    $region15: #{decoder_forward.1} parent=1 // pred_check_branch
      %27 = sbr.rel (0) target = $region17
    $region16: #{decoder_forward.1} parent=1 // pred_region
      %28 = dma.done [#allocation3], 4096
    $region17: #{decoder_forward.1} parent=1 // pred_fallthru
      _
    %v29 = vld [vmem:[%s0] sm:$0xff]
    %v30 = vld [vmem:[%s0 + $0x8] sm:$0xff]
    %v31 = vld [vmem:[#allocation2] sm:$0xff]
    %v32 = vld [vmem:[#allocation2 + $0x8] sm:$0xff]
    %v33 = vld [vmem:[#allocation2 + $0x10] sm:$0xff]
    %v34 = vld [vmem:[#allocation2 + $0x18] sm:$0xff]
    %v35 = vld [vmem:[#allocation2 + $0x20] sm:$0xff]
    %v36 = vld [vmem:[#allocation2 + $0x28] sm:$0xff]
    %v37 = vld [vmem:[#allocation2 + $0x30] sm:$0xff]
    %v38 = vld [vmem:[#allocation2 + $0x38] sm:$0xff]
    %v39 = vld [vmem:[#allocation2 + $0x40] sm:$0xff]
    %v40 = vld [vmem:[#allocation2 + $0x48] sm:$0xff]
    %v41 = vld [vmem:[#allocation2 + $0x50] sm:$0xff]
    %v42 = vld [vmem:[#allocation2 + $0x58] sm:$0xff]
    %v43 = vld [vmem:[#allocation2 + $0x60] sm:$0xff]
    %v44 = vld [vmem:[#allocation2 + $0x68] sm:$0xff]
    %v45 = vld [vmem:[#allocation2 + $0x70] sm:$0xff]
    %v46 = vld [vmem:[#allocation2 + $0x78] sm:$0xff]
    %v47 = vld [vmem:[#allocation2 + $0x80] sm:$0xff]
    %v48 = vld [vmem:[#allocation2 + $0x88] sm:$0xff]
    %v49 = vld [vmem:[#allocation2 + $0x90] sm:$0xff]
    %v50 = vld [vmem:[#allocation2 + $0x98] sm:$0xff]
    %v51 = vld [vmem:[#allocation2 + $0xa0] sm:$0xff]
    %v52 = vld [vmem:[#allocation2 + $0xa8] sm:$0xff]
    %v53 = vld [vmem:[#allocation2 + $0xb0] sm:$0xff]
    %v54 = vld [vmem:[#allocation2 + $0xb8] sm:$0xff]
    %v55 = vld [vmem:[#allocation2 + $0xc0] sm:$0xff]
    %v56 = vld [vmem:[#allocation2 + $0xc8] sm:$0xff]
    %v57 = vld [vmem:[#allocation2 + $0xd0] sm:$0xff]
    %v58 = vld [vmem:[#allocation2 + $0xd8] sm:$0xff]
    %v59 = vld [vmem:[#allocation2 + $0xe0] sm:$0xff]
    %v60 = vld [vmem:[#allocation2 + $0xe8] sm:$0xff]
    %v61 = vld [vmem:[#allocation2 + $0xf0] sm:$0xff]
    %v62 = vld [vmem:[#allocation2 + $0xf8] sm:$0xff]
    %v63 = vld [vmem:[%s2] sm:$0x3]
    %v65 = vlaneseq
    %v66 = vshrl.u32 %v65, 7
    %v67 = vsub.s32 0, %v66
    %v68 = vrot.slane %v63, %v67
    %v69 = vlaneseq
    %v70 = vshrl.u32 %v69, 7
    %v71 = vsub.s32 1, %v70
    %v72 = vrot.slane %v63, %v71
    %75 = vmatprep.subr.mxu0 0.0
    %76 = vmatpush1.xpose.msra.mxu0 %v31
    %77 = vmatprep.subr.mxu0 0.0
    %78 = vmatpush1.xpose.msra.mxu0 %v32
    %79 = vmatprep.subr.mxu0 0.0
    %80 = vmatpush1.xpose.msra.mxu0 %v33
    %81 = vmatprep.subr.mxu0 0.0
    %82 = vmatpush1.xpose.msra.mxu0 %v34
    %83 = vmatprep.subr.mxu0 0.0
    %84 = vmatpush1.xpose.msra.mxu0 %v35
    %85 = vmatprep.subr.mxu0 0.0
    %86 = vmatpush1.xpose.msra.mxu0 %v36
    %87 = vmatprep.subr.mxu0 0.0
    %88 = vmatpush1.xpose.msra.mxu0 %v37
    %89 = vmatprep.subr.mxu0 0.0
    %90 = vmatpush1.xpose.msra.mxu0 %v38
    %91 = vmatprep.subr.mxu0 0.0
    %92 = vmatpush1.xpose.msra.mxu0 %v39
    %93 = vmatprep.subr.mxu0 0.0
    %94 = vmatpush1.xpose.msra.mxu0 %v40
    %95 = vmatprep.subr.mxu0 0.0
    %96 = vmatpush1.xpose.msra.mxu0 %v41
    %97 = vmatprep.subr.mxu0 0.0
    %98 = vmatpush1.xpose.msra.mxu0 %v42
    %99 = vmatprep.subr.mxu0 0.0
    %100 = vmatpush1.xpose.msra.mxu0 %v43
    %101 = vmatprep.subr.mxu0 0.0
    %102 = vmatpush1.xpose.msra.mxu0 %v44
    %103 = vmatprep.subr.mxu0 0.0
    %104 = vmatpush1.xpose.msra.mxu0 %v45
    %105 = vmatprep.subr.mxu0 0.0
    %106 = vmatpush1.xpose.msra.mxu0 %v46
    %107 = vmatprep.subr.mxu0 0.0
    %108 = vmatpush1.xpose.msra.mxu0 %v47
    %109 = vmatprep.subr.mxu0 0.0
    %110 = vmatpush1.xpose.msra.mxu0 %v48
    %111 = vmatprep.subr.mxu0 0.0
    %112 = vmatpush1.xpose.msra.mxu0 %v49
    %113 = vmatprep.subr.mxu0 0.0
    %114 = vmatpush1.xpose.msra.mxu0 %v50
    %115 = vmatprep.subr.mxu0 0.0
    %116 = vmatpush1.xpose.msra.mxu0 %v51
    %117 = vmatprep.subr.mxu0 0.0
    %118 = vmatpush1.xpose.msra.mxu0 %v52
    %119 = vmatprep.subr.mxu0 0.0
    %120 = vmatpush1.xpose.msra.mxu0 %v53
    %121 = vmatprep.subr.mxu0 0.0
    %122 = vmatpush1.xpose.msra.mxu0 %v54
    %123 = vmatprep.subr.mxu0 0.0
    %124 = vmatpush1.xpose.msra.mxu0 %v55
    %125 = vmatprep.subr.mxu0 0.0
    %126 = vmatpush1.xpose.msra.mxu0 %v56
    %127 = vmatprep.subr.mxu0 0.0
    %128 = vmatpush1.xpose.msra.mxu0 %v57
    %129 = vmatprep.subr.mxu0 0.0
    %130 = vmatpush1.xpose.msra.mxu0 %v58
    %131 = vmatprep.subr.mxu0 0.0
    %132 = vmatpush1.xpose.msra.mxu0 %v59
    %133 = vmatprep.subr.mxu0 0.0
    %134 = vmatpush1.xpose.msra.mxu0 %v60
    %135 = vmatprep.subr.mxu0 0.0
    %136 = vmatpush1.xpose.msra.mxu0 %v61
    %137 = vmatprep.subr.mxu0 0.0
    %138 = vmatpush1.xpose.msra.mxu0 %v62
    %139 = vmatprep.mubr.f32.mxu0 0.0
    %140 = vmatmul.mubr.f32.gmra.mrb[0].mxu0 %v29
    %v141 = vpop.f32.mrb[0].mxu0
    %v142 = vadd.f32 %v68, %v141
    %v143 = vpop.f32.mrb[0].mxu0
    %v144 = vadd.f32 %v72, %v143
    %145 = vmatprep.mubr.f32.mxu0 0.0
    %146 = vmatmul.mubr.f32.gmra.mrb[0].mxu0 %v30
    %v147 = vpop.f32.mrb[0].mxu0
    %v148 = vadd.f32 %v68, %v147
    %v149 = vpop.f32.mrb[0].mxu0
    %v150 = vadd.f32 %v72, %v149
    %151 = vdwg.mxu0
    %152 = vst [vmem:[#allocation5] sm:$0xff] %v142
    %153 = vst [vmem:[#allocation5 + $0x8] sm:$0xff] %v144
    %154 = vst [vmem:[#allocation5 + $0x10] sm:$0xff] %v148
    %155 = vst [vmem:[#allocation5 + $0x18] sm:$0xff] %v150
    // Predicated region
    $region18: #{decoder_forward.1} parent=1 // pred_check
      _
    $region19: #{decoder_forward.1} parent=1 // pred_check_branch
      %157 = sbr.rel (0) target = $region21
    $region20: #{decoder_forward.1} parent=1 // pred_region
      %s159 = ssub.s32 512, 512
      %160 = vsyncadd [#allocation4], %s159
      %s161 = sshll.u32 [#allocation5], 4
      %s162 = int_to_ptr.vmem [resolvable:$true] %s161
      %167 = dma.vmem_to_hbm [thread:$0]  %s162, 512, %s3, [#allocation4], 256, 256, 16
    $region21: #{decoder_forward.1} parent=1 // pred_fallthru
      _
    // Predicated region
    $region22: #{decoder_forward.1} parent=1 // pred_check
      _
    $region23: #{decoder_forward.1} parent=1 // pred_check_branch
      %169 = sbr.rel (0) target = $region25
    $region24: #{decoder_forward.1} parent=1 // pred_region
      %170 = dma.done [#allocation4], 512
    $region25: #{decoder_forward.1} parent=1 // pred_fallthru
      _
    %171 = vsyncpa [#allocation3], 1
    %172 = vsyncpa [#allocation4], 1

</llo_original>
